<compile_context>
chip_gen: v6e
topology: v6e:2x2x1
jax: 0.10.0
libtpu: 0.0.40
codegen_flags: <defaults>
</compile_context>

<pallas_src>
import functools

import jax
import jax.numpy as jnp
import numpy as np
from jax.experimental import pallas as pl
from jax.experimental.pallas import tpu as pltpu


def _shift_flat(x, s):
    """t[p] = x[p + s] with zero fill outside [0, HW) (flattened row-major)."""
    C, HW = x.shape
    if s == 0:
        return x
    if s > 0:
        return jnp.concatenate([x[:, s:], jnp.zeros((C, s), x.dtype)], axis=1)
    return jnp.concatenate([jnp.zeros((C, -s), x.dtype), x[:, :HW + s]], axis=1)


def _conv3x3_flat(x, w_ref, b_ref, mask_l, mask_r, W):
    """3x3, stride-1, pad-1 conv on a flattened (C, H*W) activation.

    Builds the (9C, H*W) im2col slab and does one MXU matmul (K = 9*C).
    Vertical out-of-bounds taps are handled by the zero-filled shift;
    horizontal ones by the column-edge masks.
    """
    cols = []
    for kh in range(3):
        for kw in range(3):
            s = (kh - 1) * W + (kw - 1)
            t = _shift_flat(x, s)
            if kw == 0:        # tap reads column w-1: invalid where w == 0
                t = t * mask_l
            elif kw == 2:      # tap reads column w+1: invalid where w == W-1
                t = t * mask_r
            cols.append(t)
    xcol = jnp.concatenate(cols, axis=0)                    # (9C, HW)
    y = jnp.dot(w_ref[...], xcol, preferred_element_type=jnp.float32)
    return y + b_ref[...]                                   # (C, HW)


def _layernorm(y, g_ref, b_ref, eps=1e-5):
    # nn.LayerNorm([C, H, W]): per-sample mean/var over all of C,H,W.
    mean = jnp.mean(y)
    var = jnp.mean(jnp.square(y - mean))
    return (y - mean) * jax.lax.rsqrt(var + eps) * g_ref[...] + b_ref[...]


def _resnet_block_kernel(*refs, W, norm_type):
    if norm_type == "layer":
        (x_ref, em_ref, w1_ref, b1_ref, g1_ref, bt1_ref,
         w2_ref, b2_ref, g2_ref, bt2_ref, o_ref) = refs
    else:
        (x_ref, em_ref, w1_ref, b1_ref, w2_ref, b2_ref, o_ref) = refs
        g1_ref = bt1_ref = g2_ref = bt2_ref = None

    xi = x_ref[0]                     # (C, H*W)  residual / conv1 input
    mask_l = em_ref[0:1, :]           # (1, H*W)  0.0 where w == 0
    mask_r = em_ref[1:2, :]           # (1, H*W)  0.0 where w == W-1

    # conv1 (+ norm1) + relu
    y = _conv3x3_flat(xi, w1_ref, b1_ref, mask_l, mask_r, W)
    if norm_type == "layer":
        y = _layernorm(y, g1_ref, bt1_ref)
    y = jnp.maximum(y, 0.0)

    # conv2 (+ norm2)
    y = _conv3x3_flat(y, w2_ref, b2_ref, mask_l, mask_r, W)
    if norm_type == "layer":
        y = _layernorm(y, g2_ref, bt2_ref)

    # residual add + final relu, lane-dense store
    y = jnp.maximum(y + xi, 0.0)
    o_ref[0] = y.astype(o_ref.dtype)


def _im2col_weight(w):
    """(C_out, C_in, 3, 3) -> (C_out, 9*C_in), tap-major (kh,kw), channel-minor."""
    C_out, C_in, kh, kw = w.shape
    return jnp.transpose(w, (0, 2, 3, 1)).reshape(C_out, kh * kw * C_in)


def resnet_block_forward(x, params, norm_type=None):
    """Fused ResNetBlock forward.  x: (N, C, H, W) float32."""
    if norm_type == "batch":
        # TODO(synk): training-mode BatchNorm2d needs cross-batch statistics;
        # not implemented in the fused kernel (eval-mode BN is a per-channel
        # affine and could be folded into the conv bias/scale instead).
        raise NotImplementedError("norm_type='batch' not supported")

    N, C, H, W = x.shape
    HW = H * W
    x_flat = x.reshape(N, C, HW)                          # metadata-only

    # Column-edge validity masks for the horizontal taps (computed once).
    w_idx = np.arange(HW, dtype=np.int64) % W
    edge_mask = jnp.asarray(
        np.stack([(w_idx != 0), (w_idx != W - 1)]).astype(np.float32))  # (2, HW)

    w1 = _im2col_weight(params["w1"])
    w2 = _im2col_weight(params["w2"])
    b1 = params["b1"].reshape(C, 1)
    b2 = params["b2"].reshape(C, 1)

    const2 = lambda n: (0, 0)
    per_n = pl.BlockSpec((1, C, HW), lambda n: (n, 0, 0))

    inputs = [x_flat, edge_mask, w1, b1]
    in_specs = [per_n,
                pl.BlockSpec((2, HW), const2),
                pl.BlockSpec((C, 9 * C), const2),
                pl.BlockSpec((C, 1), const2)]
    if norm_type == "layer":
        inputs += [params["g1"].reshape(C, HW), params["bt1"].reshape(C, HW)]
        in_specs += [pl.BlockSpec((C, HW), const2)] * 2
    inputs += [w2, b2]
    in_specs += [pl.BlockSpec((C, 9 * C), const2), pl.BlockSpec((C, 1), const2)]
    if norm_type == "layer":
        inputs += [params["g2"].reshape(C, HW), params["bt2"].reshape(C, HW)]
        in_specs += [pl.BlockSpec((C, HW), const2)] * 2

    kernel = functools.partial(_resnet_block_kernel, W=W, norm_type=norm_type)

    out_flat = pl.pallas_call(
        kernel,
        out_shape=jax.ShapeDtypeStruct((N, C, HW), jnp.float32),
        grid=(N,),
        in_specs=in_specs,
        out_specs=per_n,
        compiler_params=pltpu.CompilerParams(
            dimension_semantics=("parallel",)),
    )(*inputs)
    return out_flat.reshape(N, C, H, W)


# -------- deterministic parameters + pure-JAX reference (correctness only) ---
def init_params(key, nfilts, npix, norm_type=None):
    k1, k2, k3, k4, k5, k6, k7, k8 = jax.random.split(key, 8)
    s = 0.1
    p = dict(
        w1=s * jax.random.normal(k1, (nfilts, nfilts, 3, 3), jnp.float32),
        b1=s * jax.random.normal(k2, (nfilts,), jnp.float32),
        w2=s * jax.random.normal(k3, (nfilts, nfilts, 3, 3), jnp.float32),
        b2=s * jax.random.normal(k4, (nfilts,), jnp.float32),
    )
    if norm_type == "layer":
        shape = (nfilts, npix, npix)
        p["g1"] = 1.0 + s * jax.random.normal(k5, shape, jnp.float32)
        p["bt1"] = s * jax.random.normal(k6, shape, jnp.float32)
        p["g2"] = 1.0 + s * jax.random.normal(k7, shape, jnp.float32)
        p["bt2"] = s * jax.random.normal(k8, shape, jnp.float32)
    return p


def _ref_forward(x, params, norm_type=None):
    def conv2d(x, w, b):
        y = jax.lax.conv_general_dilated(
            x, w, window_strides=(1, 1), padding=((1, 1), (1, 1)),
            dimension_numbers=("NCHW", "OIHW", "NCHW"))
        return y + b[None, :, None, None]

    def layernorm(y, g, b, eps=1e-5):
        mean = jnp.mean(y, axis=(1, 2, 3), keepdims=True)
        var = jnp.mean(jnp.square(y - mean), axis=(1, 2, 3), keepdims=True)
        return (y - mean) * jax.lax.rsqrt(var + eps) * g[None] + b[None]

    out = conv2d(x, params["w1"], params["b1"])
    if norm_type == "layer":
        out = layernorm(out, params["g1"], params["bt1"])
    out = jnp.maximum(out, 0.0)
    out = conv2d(out, params["w2"], params["b2"])
    if norm_type == "layer":
        out = layernorm(out, params["g2"], params["bt2"])
    out = jnp.maximum(out + x, 0.0)
    return out


if __name__ == "__main__":
    N, nfilts, npix = 2, 32, 16
    key = jax.random.PRNGKey(0)
    key, kx = jax.random.split(key)
    x = jax.random.normal(kx, (N, nfilts, npix, npix), jnp.float32)

    fwd = jax.jit(resnet_block_forward, static_argnames=("norm_type",))

    for norm_type in (None, "layer"):
        key, kp = jax.random.split(key)
        params = init_params(kp, nfilts, npix, norm_type)

        out = jax.block_until_ready(fwd(x, params, norm_type=norm_type))
        ref = jax.block_until_ready(_ref_forward(x, params, norm_type=norm_type))

        np.testing.assert_allclose(np.asarray(out), np.asarray(ref),
                                   rtol=2e-3, atol=2e-3)
        assert out.shape == (N, nfilts, npix, npix)

    print("KERNEL_OK")
</pallas_src>

<mosaic_0001>
module attributes {stable_mosaic.version = 11 : i64} {
  func.func @_resnet_block_kernel(%arg0: i32, %arg1: memref<1x32x256xf32, #tpu.memory_space<vmem>>, %arg2: memref<2x256xf32, #tpu.memory_space<vmem>>, %arg3: memref<32x288xf32, #tpu.memory_space<vmem>>, %arg4: memref<32x1xf32, #tpu.memory_space<vmem>>, %arg5: memref<32x288xf32, #tpu.memory_space<vmem>>, %arg6: memref<32x1xf32, #tpu.memory_space<vmem>>, %arg7: memref<1x32x256xf32, #tpu.memory_space<vmem>>) attributes {dimension_semantics = [#tpu.dimension_semantics<parallel>], iteration_bounds = array<i64: 2>, scalar_prefetch = 0 : i64, scratch_operands = 0 : i64, tpu.core_type = #tpu.core_type<tc>, window_params = [{transform_indices = @transform_0, window_bounds = array<i64: 1, 32, 256>}, {pipeline_mode = #tpu.pipeline_mode<synchronous>, transform_indices = @transform_1, window_bounds = array<i64: 2, 256>}, {pipeline_mode = #tpu.pipeline_mode<synchronous>, transform_indices = @transform_2, window_bounds = array<i64: 32, 288>}, {pipeline_mode = #tpu.pipeline_mode<synchronous>, transform_indices = @transform_3, window_bounds = array<i64: 32, 1>}, {pipeline_mode = #tpu.pipeline_mode<synchronous>, transform_indices = @transform_4, window_bounds = array<i64: 32, 288>}, {pipeline_mode = #tpu.pipeline_mode<synchronous>, transform_indices = @transform_5, window_bounds = array<i64: 32, 1>}, {transform_indices = @transform_6, window_bounds = array<i64: 1, 32, 256>}]} {
    %c0 = arith.constant 0 : index
    %c0_0 = arith.constant 0 : index
    %c0_1 = arith.constant 0 : index
    %0 = vector.load %arg1[%c0, %c0_0, %c0_1] : memref<1x32x256xf32, #tpu.memory_space<vmem>>, vector<1x32x256xf32>
    %1 = vector.shape_cast %0 : vector<1x32x256xf32> to vector<32x256xf32>
    %c0_2 = arith.constant 0 : index
    %c0_3 = arith.constant 0 : index
    %2 = vector.load %arg2[%c0_2, %c0_3] : memref<2x256xf32, #tpu.memory_space<vmem>>, vector<1x256xf32>
    %c1 = arith.constant 1 : index
    %c0_4 = arith.constant 0 : index
    %3 = vector.load %arg2[%c1, %c0_4] : memref<2x256xf32, #tpu.memory_space<vmem>>, vector<1x256xf32>
    %cst = arith.constant 0.000000e+00 : f32
    %4 = vector.broadcast %cst : f32 to vector<32x17xf32>
    %5 = vector.extract_strided_slice %1 {offsets = [0, 0], sizes = [32, 239], strides = [1, 1]} : vector<32x256xf32> to vector<32x239xf32>
    %6 = tpu.concatenate %4, %5 in 1 : vector<32x17xf32>, vector<32x239xf32> -> vector<32x256xf32>
    %7 = vector.broadcast %2 : vector<1x256xf32> to vector<32x256xf32>
    %8 = arith.mulf %6, %7 : vector<32x256xf32>
    %cst_5 = arith.constant 0.000000e+00 : f32
    %9 = vector.broadcast %cst_5 : f32 to vector<32x16xf32>
    %10 = vector.extract_strided_slice %1 {offsets = [0, 0], sizes = [32, 240], strides = [1, 1]} : vector<32x256xf32> to vector<32x240xf32>
    %11 = tpu.concatenate %9, %10 in 1 : vector<32x16xf32>, vector<32x240xf32> -> vector<32x256xf32>
    %cst_6 = arith.constant 0.000000e+00 : f32
    %12 = vector.broadcast %cst_6 : f32 to vector<32x15xf32>
    %13 = vector.extract_strided_slice %1 {offsets = [0, 0], sizes = [32, 241], strides = [1, 1]} : vector<32x256xf32> to vector<32x241xf32>
    %14 = tpu.concatenate %12, %13 in 1 : vector<32x15xf32>, vector<32x241xf32> -> vector<32x256xf32>
    %15 = vector.broadcast %3 : vector<1x256xf32> to vector<32x256xf32>
    %16 = arith.mulf %14, %15 : vector<32x256xf32>
    %cst_7 = arith.constant 0.000000e+00 : f32
    %17 = vector.broadcast %cst_7 : f32 to vector<32x1xf32>
    %18 = vector.extract_strided_slice %1 {offsets = [0, 0], sizes = [32, 255], strides = [1, 1]} : vector<32x256xf32> to vector<32x255xf32>
    %19 = tpu.concatenate %17, %18 in 1 : vector<32x1xf32>, vector<32x255xf32> -> vector<32x256xf32>
    %20 = vector.broadcast %2 : vector<1x256xf32> to vector<32x256xf32>
    %21 = arith.mulf %19, %20 : vector<32x256xf32>
    %22 = vector.extract_strided_slice %1 {offsets = [0, 1], sizes = [32, 255], strides = [1, 1]} : vector<32x256xf32> to vector<32x255xf32>
    %cst_8 = arith.constant 0.000000e+00 : f32
    %23 = vector.broadcast %cst_8 : f32 to vector<32x1xf32>
    %24 = tpu.concatenate %22, %23 in 1 : vector<32x255xf32>, vector<32x1xf32> -> vector<32x256xf32>
    %25 = vector.broadcast %3 : vector<1x256xf32> to vector<32x256xf32>
    %26 = arith.mulf %24, %25 : vector<32x256xf32>
    %27 = vector.extract_strided_slice %1 {offsets = [0, 15], sizes = [32, 241], strides = [1, 1]} : vector<32x256xf32> to vector<32x241xf32>
    %cst_9 = arith.constant 0.000000e+00 : f32
    %28 = vector.broadcast %cst_9 : f32 to vector<32x15xf32>
    %29 = tpu.concatenate %27, %28 in 1 : vector<32x241xf32>, vector<32x15xf32> -> vector<32x256xf32>
    %30 = vector.broadcast %2 : vector<1x256xf32> to vector<32x256xf32>
    %31 = arith.mulf %29, %30 : vector<32x256xf32>
    %32 = vector.extract_strided_slice %1 {offsets = [0, 16], sizes = [32, 240], strides = [1, 1]} : vector<32x256xf32> to vector<32x240xf32>
    %cst_10 = arith.constant 0.000000e+00 : f32
    %33 = vector.broadcast %cst_10 : f32 to vector<32x16xf32>
    %34 = tpu.concatenate %32, %33 in 1 : vector<32x240xf32>, vector<32x16xf32> -> vector<32x256xf32>
    %35 = vector.extract_strided_slice %1 {offsets = [0, 17], sizes = [32, 239], strides = [1, 1]} : vector<32x256xf32> to vector<32x239xf32>
    %cst_11 = arith.constant 0.000000e+00 : f32
    %36 = vector.broadcast %cst_11 : f32 to vector<32x17xf32>
    %37 = tpu.concatenate %35, %36 in 1 : vector<32x239xf32>, vector<32x17xf32> -> vector<32x256xf32>
    %38 = vector.broadcast %3 : vector<1x256xf32> to vector<32x256xf32>
    %39 = arith.mulf %37, %38 : vector<32x256xf32>
    %40 = tpu.concatenate %8, %11, %16, %21, %1, %26, %31, %34, %39 in 0 : vector<32x256xf32>, vector<32x256xf32>, vector<32x256xf32>, vector<32x256xf32>, vector<32x256xf32>, vector<32x256xf32>, vector<32x256xf32>, vector<32x256xf32>, vector<32x256xf32> -> vector<288x256xf32>
    %c0_12 = arith.constant 0 : index
    %c0_13 = arith.constant 0 : index
    %41 = vector.load %arg3[%c0_12, %c0_13] : memref<32x288xf32, #tpu.memory_space<vmem>>, vector<32x288xf32>
    %cst_14 = arith.constant dense<0.000000e+00> : vector<32x256xf32>
    %42 = tpu.matmul %41, %40, %cst_14 {dimension_numbers = #tpu.dot_dimension_numbers<[1], [0], [0], [1], [0, 0, 1, 1], [], []>} : vector<32x288xf32>, vector<288x256xf32>, vector<32x256xf32> -> vector<32x256xf32>
    %c0_15 = arith.constant 0 : index
    %c0_16 = arith.constant 0 : index
    %43 = vector.load %arg4[%c0_15, %c0_16] : memref<32x1xf32, #tpu.memory_space<vmem>>, vector<32x1xf32>
    %44 = vector.broadcast %43 : vector<32x1xf32> to vector<32x256xf32>
    %45 = arith.addf %42, %44 : vector<32x256xf32>
    %cst_17 = arith.constant 0.000000e+00 : f32
    %46 = vector.broadcast %cst_17 : f32 to vector<32x256xf32>
    %47 = arith.maximumf %45, %46 : vector<32x256xf32>
    %cst_18 = arith.constant 0.000000e+00 : f32
    %48 = vector.broadcast %cst_18 : f32 to vector<32x17xf32>
    %49 = vector.extract_strided_slice %47 {offsets = [0, 0], sizes = [32, 239], strides = [1, 1]} : vector<32x256xf32> to vector<32x239xf32>
    %50 = tpu.concatenate %48, %49 in 1 : vector<32x17xf32>, vector<32x239xf32> -> vector<32x256xf32>
    %51 = vector.broadcast %2 : vector<1x256xf32> to vector<32x256xf32>
    %52 = arith.mulf %50, %51 : vector<32x256xf32>
    %cst_19 = arith.constant 0.000000e+00 : f32
    %53 = vector.broadcast %cst_19 : f32 to vector<32x16xf32>
    %54 = vector.extract_strided_slice %47 {offsets = [0, 0], sizes = [32, 240], strides = [1, 1]} : vector<32x256xf32> to vector<32x240xf32>
    %55 = tpu.concatenate %53, %54 in 1 : vector<32x16xf32>, vector<32x240xf32> -> vector<32x256xf32>
    %cst_20 = arith.constant 0.000000e+00 : f32
    %56 = vector.broadcast %cst_20 : f32 to vector<32x15xf32>
    %57 = vector.extract_strided_slice %47 {offsets = [0, 0], sizes = [32, 241], strides = [1, 1]} : vector<32x256xf32> to vector<32x241xf32>
    %58 = tpu.concatenate %56, %57 in 1 : vector<32x15xf32>, vector<32x241xf32> -> vector<32x256xf32>
    %59 = vector.broadcast %3 : vector<1x256xf32> to vector<32x256xf32>
    %60 = arith.mulf %58, %59 : vector<32x256xf32>
    %cst_21 = arith.constant 0.000000e+00 : f32
    %61 = vector.broadcast %cst_21 : f32 to vector<32x1xf32>
    %62 = vector.extract_strided_slice %47 {offsets = [0, 0], sizes = [32, 255], strides = [1, 1]} : vector<32x256xf32> to vector<32x255xf32>
    %63 = tpu.concatenate %61, %62 in 1 : vector<32x1xf32>, vector<32x255xf32> -> vector<32x256xf32>
    %64 = vector.broadcast %2 : vector<1x256xf32> to vector<32x256xf32>
    %65 = arith.mulf %63, %64 : vector<32x256xf32>
    %66 = vector.extract_strided_slice %47 {offsets = [0, 1], sizes = [32, 255], strides = [1, 1]} : vector<32x256xf32> to vector<32x255xf32>
    %cst_22 = arith.constant 0.000000e+00 : f32
    %67 = vector.broadcast %cst_22 : f32 to vector<32x1xf32>
    %68 = tpu.concatenate %66, %67 in 1 : vector<32x255xf32>, vector<32x1xf32> -> vector<32x256xf32>
    %69 = vector.broadcast %3 : vector<1x256xf32> to vector<32x256xf32>
    %70 = arith.mulf %68, %69 : vector<32x256xf32>
    %71 = vector.extract_strided_slice %47 {offsets = [0, 15], sizes = [32, 241], strides = [1, 1]} : vector<32x256xf32> to vector<32x241xf32>
    %cst_23 = arith.constant 0.000000e+00 : f32
    %72 = vector.broadcast %cst_23 : f32 to vector<32x15xf32>
    %73 = tpu.concatenate %71, %72 in 1 : vector<32x241xf32>, vector<32x15xf32> -> vector<32x256xf32>
    %74 = vector.broadcast %2 : vector<1x256xf32> to vector<32x256xf32>
    %75 = arith.mulf %73, %74 : vector<32x256xf32>
    %76 = vector.extract_strided_slice %47 {offsets = [0, 16], sizes = [32, 240], strides = [1, 1]} : vector<32x256xf32> to vector<32x240xf32>
    %cst_24 = arith.constant 0.000000e+00 : f32
    %77 = vector.broadcast %cst_24 : f32 to vector<32x16xf32>
    %78 = tpu.concatenate %76, %77 in 1 : vector<32x240xf32>, vector<32x16xf32> -> vector<32x256xf32>
    %79 = vector.extract_strided_slice %47 {offsets = [0, 17], sizes = [32, 239], strides = [1, 1]} : vector<32x256xf32> to vector<32x239xf32>
    %cst_25 = arith.constant 0.000000e+00 : f32
    %80 = vector.broadcast %cst_25 : f32 to vector<32x17xf32>
    %81 = tpu.concatenate %79, %80 in 1 : vector<32x239xf32>, vector<32x17xf32> -> vector<32x256xf32>
    %82 = vector.broadcast %3 : vector<1x256xf32> to vector<32x256xf32>
    %83 = arith.mulf %81, %82 : vector<32x256xf32>
    %84 = tpu.concatenate %52, %55, %60, %65, %47, %70, %75, %78, %83 in 0 : vector<32x256xf32>, vector<32x256xf32>, vector<32x256xf32>, vector<32x256xf32>, vector<32x256xf32>, vector<32x256xf32>, vector<32x256xf32>, vector<32x256xf32>, vector<32x256xf32> -> vector<288x256xf32>
    %c0_26 = arith.constant 0 : index
    %c0_27 = arith.constant 0 : index
    %85 = vector.load %arg5[%c0_26, %c0_27] : memref<32x288xf32, #tpu.memory_space<vmem>>, vector<32x288xf32>
    %cst_28 = arith.constant dense<0.000000e+00> : vector<32x256xf32>
    %86 = tpu.matmul %85, %84, %cst_28 {dimension_numbers = #tpu.dot_dimension_numbers<[1], [0], [0], [1], [0, 0, 1, 1], [], []>} : vector<32x288xf32>, vector<288x256xf32>, vector<32x256xf32> -> vector<32x256xf32>
    %c0_29 = arith.constant 0 : index
    %c0_30 = arith.constant 0 : index
    %87 = vector.load %arg6[%c0_29, %c0_30] : memref<32x1xf32, #tpu.memory_space<vmem>>, vector<32x1xf32>
    %88 = vector.broadcast %87 : vector<32x1xf32> to vector<32x256xf32>
    %89 = arith.addf %86, %88 : vector<32x256xf32>
    %90 = arith.addf %89, %1 : vector<32x256xf32>
    %cst_31 = arith.constant 0.000000e+00 : f32
    %91 = vector.broadcast %cst_31 : f32 to vector<32x256xf32>
    %92 = arith.maximumf %90, %91 : vector<32x256xf32>
    %c0_32 = arith.constant 0 : index
    %c0_33 = arith.constant 0 : index
    %c0_34 = arith.constant 0 : index
    %93 = vector.load %arg7[%c0_32, %c0_33, %c0_34] : memref<1x32x256xf32, #tpu.memory_space<vmem>>, vector<1x32x256xf32>
    %94 = vector.shape_cast %93 : vector<1x32x256xf32> to vector<32x256xf32>
    %95 = vector.shape_cast %92 : vector<32x256xf32> to vector<1x32x256xf32>
    tpu.vector_store %arg7[%c0_32, %c0_33, %c0_34], %95 {strides = array<i32>} : memref<1x32x256xf32, #tpu.memory_space<vmem>>, vector<1x32x256xf32>,
    return
  }
  func.func @transform_0(%arg0: i32) -> (i32, i32, i32) {
    %c0_i32 = arith.constant 0 : i32
    %c0_i32_0 = arith.constant 0 : i32
    %c0_i32_1 = arith.constant 0 : i32
    return %arg0, %c0_i32, %c0_i32_0 : i32, i32, i32
  }
  func.func @transform_1(%arg0: i32) -> (i32, i32) {
    %c0_i32 = arith.constant 0 : i32
    %c0_i32_0 = arith.constant 0 : i32
    %c0_i32_1 = arith.constant 0 : i32
    return %c0_i32, %c0_i32_0 : i32, i32
  }
  func.func @transform_2(%arg0: i32) -> (i32, i32) {
    %c0_i32 = arith.constant 0 : i32
    %c0_i32_0 = arith.constant 0 : i32
    %c0_i32_1 = arith.constant 0 : i32
    return %c0_i32, %c0_i32_0 : i32, i32
  }
  func.func @transform_3(%arg0: i32) -> (i32, i32) {
    %c0_i32 = arith.constant 0 : i32
    %c0_i32_0 = arith.constant 0 : i32
    %c0_i32_1 = arith.constant 0 : i32
    return %c0_i32, %c0_i32_0 : i32, i32
  }
  func.func @transform_4(%arg0: i32) -> (i32, i32) {
    %c0_i32 = arith.constant 0 : i32
    %c0_i32_0 = arith.constant 0 : i32
    %c0_i32_1 = arith.constant 0 : i32
    return %c0_i32, %c0_i32_0 : i32, i32
  }
  func.func @transform_5(%arg0: i32) -> (i32, i32) {
    %c0_i32 = arith.constant 0 : i32
    %c0_i32_0 = arith.constant 0 : i32
    %c0_i32_1 = arith.constant 0 : i32
    return %c0_i32, %c0_i32_0 : i32, i32
  }
  func.func @transform_6(%arg0: i32) -> (i32, i32, i32) {
    %c0_i32 = arith.constant 0 : i32
    %c0_i32_0 = arith.constant 0 : i32
    %c0_i32_1 = arith.constant 0 : i32
    return %arg0, %c0_i32, %c0_i32_0 : i32, i32, i32
  }
}

</mosaic_0001>

<llo_original>
// kernel: resnet_block_forward.1
$region0: #{resnet_block_forward.1}
  #allocation0 [shape = 'u32[]', space=smem, size = 0x4, offset = 0x4, fixed_abs, tag = 'smem constant byte address 0x4 - core index']
  #allocation1 [shape = 'u32[144,128]{1,0:T(1,128)}', space=vmem, size = 0x12000, scoped, tag = 'internal scratch']
  %s0 = inlined_call_operand.vmem [shape: f32[2,32,256], index: 0, kind: input, shape index: {}]
  %s1 = inlined_call_operand.vmem [shape: f32[2,256], index: 1, kind: input, shape index: {}]
  %s2 = inlined_call_operand.vmem [shape: f32[32,288], index: 2, kind: input, shape index: {}]
  %s3 = inlined_call_operand.vmem [shape: f32[32,1], index: 3, kind: input, shape index: {}]
  %s4 = inlined_call_operand.vmem [shape: f32[32,288], index: 4, kind: input, shape index: {}]
  %s5 = inlined_call_operand.vmem [shape: f32[32,1], index: 5, kind: input, shape index: {}]
  %s6 = inlined_call_operand.vmem [shape: f32[2,32,256], index: 6, kind: output, shape index: {}]
  %s7 = sld [smem:[#allocation0]]
  $region57: #{resnet_block_forward.1} parent=0
    _
  %s9 = ssub.s32 1, %s7
  %s10 = scalar_select 0, %s9, %s7
  loop: start=0, step=1, limit=4
  $region2: #{resnet_block_forward.1} parent=0 // loop_pre_header
    _
  $region3: #{resnet_block_forward.1} parent=0 // loop_header
    %s12 = sphi 0, %s16
    %p13 = scmp.ge.s32.totalorder %s12, 4
    %s22 = sphi 0, %s24
    %s25 = sphi 0, %s22
    %s26 = sphi 0, %s25
    %s42 = sphi 0, %s26
    %s46 = sphi 0, %s46
    %s48 = sphi 0, %s46
    %s49 = sphi 0, %s48
    %s63 = sphi 0, %s49
    %s67 = sphi 0, %s67
    %s69 = sphi 0, %s67
    %s70 = sphi 0, %s69
    %s84 = sphi 0, %s70
    %s88 = sphi 0, %s88
    %s90 = sphi 0, %s88
    %s91 = sphi 0, %s90
    %s105 = sphi 0, %s91
    %s109 = sphi 0, %s109
    %s111 = sphi 0, %s109
    %s112 = sphi 0, %s111
    %s126 = sphi 0, %s112
    %s130 = sphi 0, %s130
    %s132 = sphi 0, %s130
    %s133 = sphi 0, %s132
    %s147 = sphi 0, %s133
    %s153 = sphi 0, %s155
    %s156 = sphi 0, %s153
    %s157 = sphi 0, %s156
    %s173 = sphi 0, %s157
  $region4: #{resnet_block_forward.1} parent=0 // loop_header_branch
    %15 = sbr.rel (%p13) target = $region8
  $region5: #{resnet_block_forward.1} parent=0 // loop_body
    %s17 = ssub.s32 %s12, 1
    %s18 = ssub.s32 %s12, 2
    %s19 = sadd.s32 %s12, 1
    %s20 = ssub.s32 %s12, %s19
    %p21 = scmp.eq.s32.totalorder %s20, 0
    %s23 = sadd.s32 %s22, 1
    %s24 = scalar_select %p21, %s22, %s23
    %p27 = pneg %p21
    %p28 = scmp.eq.s32.totalorder %s12, 1
    %p29 = por %p27, %p28
    %p30 = scmp.ne.s32.totalorder %s22, %s25
    %p31 = scmp.eq.s32.totalorder %s12, 0
    %p32 = por %p30, %p31
    %p33 = scmp.ne.s32.totalorder %s22, %s25
    %p34 = scmp.eq.s32.totalorder %s17, 1
    %p35 = por %p33, %p34
    %p36 = scmp.ne.s32.totalorder %s25, %s26
    %p37 = scmp.eq.s32.totalorder %s17, 0
    %p38 = por %p36, %p37
    %p39 = scmp.ne.s32.totalorder %s25, %s26
    %p40 = scmp.eq.s32.totalorder %s18, 1
    %p41 = por %p39, %p40
    %p43 = scmp.ne.s32.totalorder %s26, %s42
    %p44 = scmp.eq.s32.totalorder %s18, 0
    %p45 = por %p43, %p44
    %s47 = sadd.s32 %s46, 1
    %p50 = scmp.eq.s32.totalorder %s12, 1
    %p51 = scmp.ne.s32.totalorder %s46, %s48
    %p52 = scmp.eq.s32.totalorder %s12, 0
    %p53 = por %p51, %p52
    %p54 = scmp.ne.s32.totalorder %s46, %s48
    %p55 = scmp.eq.s32.totalorder %s17, 1
    %p56 = por %p54, %p55
    %p57 = scmp.ne.s32.totalorder %s48, %s49
    %p58 = scmp.eq.s32.totalorder %s17, 0
    %p59 = por %p57, %p58
    %p60 = scmp.ne.s32.totalorder %s48, %s49
    %p61 = scmp.eq.s32.totalorder %s18, 1
    %p62 = por %p60, %p61
    %p64 = scmp.ne.s32.totalorder %s49, %s63
    %p65 = scmp.eq.s32.totalorder %s18, 0
    %p66 = por %p64, %p65
    %s68 = sadd.s32 %s67, 1
    %p71 = scmp.eq.s32.totalorder %s12, 1
    %p72 = scmp.ne.s32.totalorder %s67, %s69
    %p73 = scmp.eq.s32.totalorder %s12, 0
    %p74 = por %p72, %p73
    %p75 = scmp.ne.s32.totalorder %s67, %s69
    %p76 = scmp.eq.s32.totalorder %s17, 1
    %p77 = por %p75, %p76
    %p78 = scmp.ne.s32.totalorder %s69, %s70
    %p79 = scmp.eq.s32.totalorder %s17, 0
    %p80 = por %p78, %p79
    %p81 = scmp.ne.s32.totalorder %s69, %s70
    %p82 = scmp.eq.s32.totalorder %s18, 1
    %p83 = por %p81, %p82
    %p85 = scmp.ne.s32.totalorder %s70, %s84
    %p86 = scmp.eq.s32.totalorder %s18, 0
    %p87 = por %p85, %p86
    %s89 = sadd.s32 %s88, 1
    %p92 = scmp.eq.s32.totalorder %s12, 1
    %p93 = scmp.ne.s32.totalorder %s88, %s90
    %p94 = scmp.eq.s32.totalorder %s12, 0
    %p95 = por %p93, %p94
    %p96 = scmp.ne.s32.totalorder %s88, %s90
    %p97 = scmp.eq.s32.totalorder %s17, 1
    %p98 = por %p96, %p97
    %p99 = scmp.ne.s32.totalorder %s90, %s91
    %p100 = scmp.eq.s32.totalorder %s17, 0
    %p101 = por %p99, %p100
    %p102 = scmp.ne.s32.totalorder %s90, %s91
    %p103 = scmp.eq.s32.totalorder %s18, 1
    %p104 = por %p102, %p103
    %p106 = scmp.ne.s32.totalorder %s91, %s105
    %p107 = scmp.eq.s32.totalorder %s18, 0
    %p108 = por %p106, %p107
    %s110 = sadd.s32 %s109, 1
    %p113 = scmp.eq.s32.totalorder %s12, 1
    %p114 = scmp.ne.s32.totalorder %s109, %s111
    %p115 = scmp.eq.s32.totalorder %s12, 0
    %p116 = por %p114, %p115
    %p117 = scmp.ne.s32.totalorder %s109, %s111
    %p118 = scmp.eq.s32.totalorder %s17, 1
    %p119 = por %p117, %p118
    %p120 = scmp.ne.s32.totalorder %s111, %s112
    %p121 = scmp.eq.s32.totalorder %s17, 0
    %p122 = por %p120, %p121
    %p123 = scmp.ne.s32.totalorder %s111, %s112
    %p124 = scmp.eq.s32.totalorder %s18, 1
    %p125 = por %p123, %p124
    %p127 = scmp.ne.s32.totalorder %s112, %s126
    %p128 = scmp.eq.s32.totalorder %s18, 0
    %p129 = por %p127, %p128
    %s131 = sadd.s32 %s130, 1
    %p134 = scmp.eq.s32.totalorder %s12, 1
    %p135 = scmp.ne.s32.totalorder %s130, %s132
    %p136 = scmp.eq.s32.totalorder %s12, 0
    %p137 = por %p135, %p136
    %p138 = scmp.ne.s32.totalorder %s130, %s132
    %p139 = scmp.eq.s32.totalorder %s17, 1
    %p140 = por %p138, %p139
    %p141 = scmp.ne.s32.totalorder %s132, %s133
    %p142 = scmp.eq.s32.totalorder %s17, 0
    %p143 = por %p141, %p142
    %p144 = scmp.ne.s32.totalorder %s132, %s133
    %p145 = scmp.eq.s32.totalorder %s18, 1
    %p146 = por %p144, %p145
    %p148 = scmp.ne.s32.totalorder %s133, %s147
    %p149 = scmp.eq.s32.totalorder %s18, 0
    %p150 = por %p148, %p149
    %s151 = ssub.s32 %s12, %s19
    %p152 = scmp.eq.s32.totalorder %s151, 0
    %s154 = sadd.s32 %s153, 1
    %s155 = scalar_select %p152, %s153, %s154
    %p158 = pneg %p152
    %p159 = scmp.eq.s32.totalorder %s12, 1
    %p160 = por %p158, %p159
    %p161 = scmp.ne.s32.totalorder %s153, %s156
    %p162 = scmp.eq.s32.totalorder %s12, 0
    %p163 = por %p161, %p162
    %p164 = scmp.ne.s32.totalorder %s153, %s156
    %p165 = scmp.eq.s32.totalorder %s17, 1
    %p166 = por %p164, %p165
    %p167 = scmp.ne.s32.totalorder %s156, %s157
    %p168 = scmp.eq.s32.totalorder %s17, 0
    %p169 = por %p167, %p168
    %p170 = scmp.ne.s32.totalorder %s156, %s157
    %p171 = scmp.eq.s32.totalorder %s18, 1
    %p172 = por %p170, %p171
    %p174 = scmp.ne.s32.totalorder %s157, %s173
    %p175 = scmp.eq.s32.totalorder %s18, 0
    %p176 = por %p174, %p175
    %p177 = scmp.le.s32.totalorder 1, %s12
    %p178 = scmp.lt.s32.totalorder %s12, 3
    %p179 = pnand %p177, %p178
    %p180 = pneg %p179
    // Predicated region
    $region9: #{resnet_block_forward.1} parent=5 // pred_check
      _
    $region10: #{resnet_block_forward.1} parent=5 // pred_check_branch
      %182 = sbr.rel (%p179) target = $region12
    $region11: #{resnet_block_forward.1} parent=5 // pred_region
      %s183 = ssub.s32 %s12, 1
      // Predicated region
      $region13: #{resnet_block_forward.1} parent=11 // pred_check
        %p184 = pneg %p59
      $region14: #{resnet_block_forward.1} parent=11 // pred_check_branch
        %186 = sbr.rel (%p184) target = $region16
      $region15: #{resnet_block_forward.1} parent=11 // pred_region
        _
      $region16: #{resnet_block_forward.1} parent=11 // pred_fallthru
        _
      // Predicated region
      $region17: #{resnet_block_forward.1} parent=11 // pred_check
        %p187 = pneg %p80
      $region18: #{resnet_block_forward.1} parent=11 // pred_check_branch
        %189 = sbr.rel (%p187) target = $region20
      $region19: #{resnet_block_forward.1} parent=11 // pred_region
        _
      $region20: #{resnet_block_forward.1} parent=11 // pred_fallthru
        _
      // Predicated region
      $region21: #{resnet_block_forward.1} parent=11 // pred_check
        %p190 = pneg %p101
      $region22: #{resnet_block_forward.1} parent=11 // pred_check_branch
        %192 = sbr.rel (%p190) target = $region24
      $region23: #{resnet_block_forward.1} parent=11 // pred_region
        _
      $region24: #{resnet_block_forward.1} parent=11 // pred_fallthru
        _
      // Predicated region
      $region25: #{resnet_block_forward.1} parent=11 // pred_check
        %p193 = pneg %p122
      $region26: #{resnet_block_forward.1} parent=11 // pred_check_branch
        %195 = sbr.rel (%p193) target = $region28
      $region27: #{resnet_block_forward.1} parent=11 // pred_region
        _
      $region28: #{resnet_block_forward.1} parent=11 // pred_fallthru
        _
      // Predicated region
      $region29: #{resnet_block_forward.1} parent=11 // pred_check
        %p196 = pneg %p143
      $region30: #{resnet_block_forward.1} parent=11 // pred_check_branch
        %198 = sbr.rel (%p196) target = $region32
      $region31: #{resnet_block_forward.1} parent=11 // pred_region
        _
      $region32: #{resnet_block_forward.1} parent=11 // pred_fallthru
        _
    $region12: #{resnet_block_forward.1} parent=5 // pred_fallthru
      _
    %p199 = scmp.lt.s32.totalorder %s12, 2
    // Predicated region
    $region33: #{resnet_block_forward.1} parent=5 // pred_check
      %p200 = pneg %p199
    $region34: #{resnet_block_forward.1} parent=5 // pred_check_branch
      %202 = sbr.rel (%p200) target = $region36
    $region35: #{resnet_block_forward.1} parent=5 // pred_region
      // Predicated region
      $region37: #{resnet_block_forward.1} parent=35 // pred_check
        %p203 = pneg %p32
      $region38: #{resnet_block_forward.1} parent=35 // pred_check_branch
        %205 = sbr.rel (%p203) target = $region40
      $region39: #{resnet_block_forward.1} parent=35 // pred_region
        %p206 = scmp.lt.s32.totalorder %s12, 1
        %s207 = scalar_select %p206, %s12, 1
        %s208 = smul.addr %s207, 8
        %s209 = smul.addr %s208, 8
        %s210 = scalar_lea.vmem %s0, %s209
      $region40: #{resnet_block_forward.1} parent=35 // pred_fallthru
        _
    $region36: #{resnet_block_forward.1} parent=5 // pred_fallthru
      _
    %p211 = scmp.le.s32.totalorder 1, %s12
    %p212 = scmp.lt.s32.totalorder %s12, 3
    %p213 = pnand %p211, %p212
    %p214 = pneg %p213
    // Predicated region
    $region41: #{resnet_block_forward.1} parent=5 // pred_check
      _
    $region42: #{resnet_block_forward.1} parent=5 // pred_check_branch
      %216 = sbr.rel (%p213) target = $region44
    $region43: #{resnet_block_forward.1} parent=5 // pred_region
      %s217 = ssub.s32 %s12, 1
      %p218 = scmp.lt.s32.totalorder %s17, 1
      %s219 = scalar_select %p218, %s17, 1
      %s220 = smul.addr %s219, 8
      %s221 = smul.addr %s220, 8
      %s222 = scalar_lea.vmem %s0, %s221
      %p223 = pneg %p38
      %p224 = pneg %p35
      %p225 = pneg %p59
      %p226 = pneg %p56
      %p227 = pneg %p80
      %p228 = pneg %p77
      %p229 = pneg %p101
      %p230 = pneg %p98
      %p231 = pneg %p122
      %p232 = pneg %p119
      %p233 = pneg %p143
      %p234 = pneg %p140
      %p235 = pneg %p169
      %p236 = pneg %p166
      %p237 = scmp.lt.s32.totalorder %s17, 1
      %s238 = scalar_select %p237, %s17, 1
      %s239 = smul.addr %s238, 8
      %s240 = smul.addr %s239, 8
      %s241 = scalar_lea.vmem %s6, %s240
      %p242 = scmp.lt.s32.totalorder %s17, 1
      %s243 = scalar_select %p242, %s17, 1
      %s244 = smul.addr %s243, 8
      %s245 = smul.addr %s244, 8
      %s246 = scalar_lea.vmem %s0, %s245
      %p247 = scmp.lt.s32.totalorder %s17, 1
      %s248 = scalar_select %p247, %s17, 1
      %s249 = smul.addr %s248, 8
      %s250 = smul.addr %s249, 8
      %s251 = scalar_lea.vmem %s6, %s250
      %v252 = vld [vmem:[%s246] sm:$0xff]
      %v253 = vld [vmem:[%s246 + $0x8] sm:$0xff]
      %v254 = vld [vmem:[%s246 + $0x10] sm:$0xff]
      %v255 = vld [vmem:[%s246 + $0x18] sm:$0xff]
      %v256 = vld [vmem:[%s246 + $0x20] sm:$0xff]
      %v257 = vld [vmem:[%s246 + $0x28] sm:$0xff]
      %v258 = vld [vmem:[%s246 + $0x30] sm:$0xff]
      %v259 = vld [vmem:[%s246 + $0x38] sm:$0xff]
      %v260 = vld [vmem:[%s1] ss:$2 sm:$0x3]
      %s261 = scalar_lea.vmem %s1, 1
      %v262 = vld [vmem:[%s261] ss:$2 sm:$0x3]
      %271 = vrot.lane.b32.xlu0 %v252, 17
      %v272 = vpop.permute.xlu0 %271
      %273 = vrot.lane.b32.xlu0 %v253, 17
      %v274 = vpop.permute.xlu0 %273
      %275 = vrot.lane.b32.xlu0 %v254, 17
      %v276 = vpop.permute.xlu0 %275
      %277 = vrot.lane.b32.xlu0 %v255, 17
      %v278 = vpop.permute.xlu0 %277
      %279 = vrot.lane.b32.xlu0 %v256, 17
      %v280 = vpop.permute.xlu0 %279
      %281 = vrot.lane.b32.xlu0 %v257, 17
      %v282 = vpop.permute.xlu0 %281
      %283 = vrot.lane.b32.xlu0 %v258, 17
      %v284 = vpop.permute.xlu0 %283
      %285 = vrot.lane.b32.xlu0 %v259, 17
      %v286 = vpop.permute.xlu0 %285
      %vm287 = vcmask 138240
      %v288 = vsel %vm287, %v272, %v274
      %v289 = vsel %vm287, %v276, %v278
      %v290 = vsel %vm287, %v280, %v282
      %v291 = vsel %vm287, %v284, %v286
      %v300 = vsel %vm287, 0.0, %v272
      %v301 = vsel %vm287, 0.0, %v276
      %v302 = vsel %vm287, 0.0, %v280
      %v303 = vsel %vm287, 0.0, %v284
      %v305 = vlaneseq
      %v306 = vshrl.u32 %v305, 7
      %v307 = vsub.s32 0, %v306
      %v308 = vrot.slane %v260, %v307
      %v309 = vlaneseq
      %v310 = vshrl.u32 %v309, 7
      %v311 = vsub.s32 1, %v310
      %v312 = vrot.slane %v260, %v311
      %v315 = vmul.f32 %v300, %v308
      %v316 = vmul.f32 %v288, %v312
      %v317 = vmul.f32 %v301, %v308
      %v318 = vmul.f32 %v289, %v312
      %v319 = vmul.f32 %v302, %v308
      %v320 = vmul.f32 %v290, %v312
      %v321 = vmul.f32 %v303, %v308
      %v322 = vmul.f32 %v291, %v312
      %323 = vrot.lane.b32.xlu0 %v252, 16
      %v324 = vpop.permute.xlu0 %323
      %325 = vrot.lane.b32.xlu0 %v253, 16
      %v326 = vpop.permute.xlu0 %325
      %327 = vrot.lane.b32.xlu0 %v254, 16
      %v328 = vpop.permute.xlu0 %327
      %329 = vrot.lane.b32.xlu0 %v255, 16
      %v330 = vpop.permute.xlu0 %329
      %331 = vrot.lane.b32.xlu0 %v256, 16
      %v332 = vpop.permute.xlu0 %331
      %333 = vrot.lane.b32.xlu0 %v257, 16
      %v334 = vpop.permute.xlu0 %333
      %335 = vrot.lane.b32.xlu0 %v258, 16
      %v336 = vpop.permute.xlu0 %335
      %337 = vrot.lane.b32.xlu0 %v259, 16
      %v338 = vpop.permute.xlu0 %337
      %vm339 = vcmask 130048
      %v340 = vsel %vm339, %v324, %v326
      %v341 = vsel %vm339, %v328, %v330
      %v342 = vsel %vm339, %v332, %v334
      %v343 = vsel %vm339, %v336, %v338
      %v352 = vsel %vm339, 0.0, %v324
      %v353 = vsel %vm339, 0.0, %v328
      %v354 = vsel %vm339, 0.0, %v332
      %v355 = vsel %vm339, 0.0, %v336
      %356 = vrot.lane.b32.xlu0 %v252, 15
      %v357 = vpop.permute.xlu0 %356
      %358 = vrot.lane.b32.xlu0 %v253, 15
      %v359 = vpop.permute.xlu0 %358
      %360 = vrot.lane.b32.xlu0 %v254, 15
      %v361 = vpop.permute.xlu0 %360
      %362 = vrot.lane.b32.xlu0 %v255, 15
      %v363 = vpop.permute.xlu0 %362
      %364 = vrot.lane.b32.xlu0 %v256, 15
      %v365 = vpop.permute.xlu0 %364
      %366 = vrot.lane.b32.xlu0 %v257, 15
      %v367 = vpop.permute.xlu0 %366
      %368 = vrot.lane.b32.xlu0 %v258, 15
      %v369 = vpop.permute.xlu0 %368
      %370 = vrot.lane.b32.xlu0 %v259, 15
      %v371 = vpop.permute.xlu0 %370
      %vm372 = vcmask 121856
      %v373 = vsel %vm372, %v357, %v359
      %v374 = vsel %vm372, %v361, %v363
      %v375 = vsel %vm372, %v365, %v367
      %v376 = vsel %vm372, %v369, %v371
      %v385 = vsel %vm372, 0.0, %v357
      %v386 = vsel %vm372, 0.0, %v361
      %v387 = vsel %vm372, 0.0, %v365
      %v388 = vsel %vm372, 0.0, %v369
      %v390 = vlaneseq
      %v391 = vshrl.u32 %v390, 7
      %v392 = vsub.s32 0, %v391
      %v393 = vrot.slane %v262, %v392
      %v394 = vlaneseq
      %v395 = vshrl.u32 %v394, 7
      %v396 = vsub.s32 1, %v395
      %v397 = vrot.slane %v262, %v396
      %v400 = vmul.f32 %v385, %v393
      %v401 = vmul.f32 %v373, %v397
      %v402 = vmul.f32 %v386, %v393
      %v403 = vmul.f32 %v374, %v397
      %v404 = vmul.f32 %v387, %v393
      %v405 = vmul.f32 %v375, %v397
      %v406 = vmul.f32 %v388, %v393
      %v407 = vmul.f32 %v376, %v397
      %408 = vrot.lane.b32.xlu0 %v252, 1
      %v409 = vpop.permute.xlu0 %408
      %410 = vrot.lane.b32.xlu0 %v253, 1
      %v411 = vpop.permute.xlu0 %410
      %412 = vrot.lane.b32.xlu0 %v254, 1
      %v413 = vpop.permute.xlu0 %412
      %414 = vrot.lane.b32.xlu0 %v255, 1
      %v415 = vpop.permute.xlu0 %414
      %416 = vrot.lane.b32.xlu0 %v256, 1
      %v417 = vpop.permute.xlu0 %416
      %418 = vrot.lane.b32.xlu0 %v257, 1
      %v419 = vpop.permute.xlu0 %418
      %420 = vrot.lane.b32.xlu0 %v258, 1
      %v421 = vpop.permute.xlu0 %420
      %422 = vrot.lane.b32.xlu0 %v259, 1
      %v423 = vpop.permute.xlu0 %422
      %vm424 = vcmask 7168
      %v425 = vsel %vm424, %v409, %v411
      %v426 = vsel %vm424, %v413, %v415
      %v427 = vsel %vm424, %v417, %v419
      %v428 = vsel %vm424, %v421, %v423
      %v437 = vsel %vm424, 0.0, %v409
      %v438 = vsel %vm424, 0.0, %v413
      %v439 = vsel %vm424, 0.0, %v417
      %v440 = vsel %vm424, 0.0, %v421
      %v441 = vmul.f32 %v437, %v308
      %v442 = vmul.f32 %v425, %v312
      %v443 = vmul.f32 %v438, %v308
      %v444 = vmul.f32 %v426, %v312
      %v445 = vmul.f32 %v439, %v308
      %v446 = vmul.f32 %v427, %v312
      %v447 = vmul.f32 %v440, %v308
      %v448 = vmul.f32 %v428, %v312
      %449 = vrot.lane.b32.xlu0 %v252, 127
      %v450 = vpop.permute.xlu0 %449
      %451 = vrot.lane.b32.xlu0 %v253, 127
      %v452 = vpop.permute.xlu0 %451
      %453 = vrot.lane.b32.xlu0 %v254, 127
      %v454 = vpop.permute.xlu0 %453
      %455 = vrot.lane.b32.xlu0 %v255, 127
      %v456 = vpop.permute.xlu0 %455
      %457 = vrot.lane.b32.xlu0 %v256, 127
      %v458 = vpop.permute.xlu0 %457
      %459 = vrot.lane.b32.xlu0 %v257, 127
      %v460 = vpop.permute.xlu0 %459
      %461 = vrot.lane.b32.xlu0 %v258, 127
      %v462 = vpop.permute.xlu0 %461
      %463 = vrot.lane.b32.xlu0 %v259, 127
      %v464 = vpop.permute.xlu0 %463
      %vm465 = vcmask 1039360
      %v466 = vsel %vm465, %v450, %v452
      %v467 = vsel %vm465, %v454, %v456
      %v468 = vsel %vm465, %v458, %v460
      %v469 = vsel %vm465, %v462, %v464
      %v478 = vsel %vm465, %v452, 0.0
      %v479 = vsel %vm465, %v456, 0.0
      %v480 = vsel %vm465, %v460, 0.0
      %v481 = vsel %vm465, %v464, 0.0
      %v482 = vmul.f32 %v466, %v393
      %v483 = vmul.f32 %v478, %v397
      %v484 = vmul.f32 %v467, %v393
      %v485 = vmul.f32 %v479, %v397
      %v486 = vmul.f32 %v468, %v393
      %v487 = vmul.f32 %v480, %v397
      %v488 = vmul.f32 %v469, %v393
      %v489 = vmul.f32 %v481, %v397
      %490 = vrot.lane.b32.xlu0 %v252, 113
      %v491 = vpop.permute.xlu0 %490
      %492 = vrot.lane.b32.xlu0 %v253, 113
      %v493 = vpop.permute.xlu0 %492
      %494 = vrot.lane.b32.xlu0 %v254, 113
      %v495 = vpop.permute.xlu0 %494
      %496 = vrot.lane.b32.xlu0 %v255, 113
      %v497 = vpop.permute.xlu0 %496
      %498 = vrot.lane.b32.xlu0 %v256, 113
      %v499 = vpop.permute.xlu0 %498
      %500 = vrot.lane.b32.xlu0 %v257, 113
      %v501 = vpop.permute.xlu0 %500
      %502 = vrot.lane.b32.xlu0 %v258, 113
      %v503 = vpop.permute.xlu0 %502
      %504 = vrot.lane.b32.xlu0 %v259, 113
      %v505 = vpop.permute.xlu0 %504
      %vm506 = vcmask 924672
      %v507 = vsel %vm506, %v491, %v493
      %v508 = vsel %vm506, %v495, %v497
      %v509 = vsel %vm506, %v499, %v501
      %v510 = vsel %vm506, %v503, %v505
      %v519 = vsel %vm506, %v493, 0.0
      %v520 = vsel %vm506, %v497, 0.0
      %v521 = vsel %vm506, %v501, 0.0
      %v522 = vsel %vm506, %v505, 0.0
      %v523 = vmul.f32 %v507, %v308
      %v524 = vmul.f32 %v519, %v312
      %v525 = vmul.f32 %v508, %v308
      %v526 = vmul.f32 %v520, %v312
      %v527 = vmul.f32 %v509, %v308
      %v528 = vmul.f32 %v521, %v312
      %v529 = vmul.f32 %v510, %v308
      %v530 = vmul.f32 %v522, %v312
      %531 = vrot.lane.b32.xlu0 %v252, 112
      %v532 = vpop.permute.xlu0 %531
      %533 = vrot.lane.b32.xlu0 %v253, 112
      %v534 = vpop.permute.xlu0 %533
      %535 = vrot.lane.b32.xlu0 %v254, 112
      %v536 = vpop.permute.xlu0 %535
      %537 = vrot.lane.b32.xlu0 %v255, 112
      %v538 = vpop.permute.xlu0 %537
      %539 = vrot.lane.b32.xlu0 %v256, 112
      %v540 = vpop.permute.xlu0 %539
      %541 = vrot.lane.b32.xlu0 %v257, 112
      %v542 = vpop.permute.xlu0 %541
      %543 = vrot.lane.b32.xlu0 %v258, 112
      %v544 = vpop.permute.xlu0 %543
      %545 = vrot.lane.b32.xlu0 %v259, 112
      %v546 = vpop.permute.xlu0 %545
      %vm547 = vcmask 916480
      %v548 = vsel %vm547, %v532, %v534
      %v549 = vsel %vm547, %v536, %v538
      %v550 = vsel %vm547, %v540, %v542
      %v551 = vsel %vm547, %v544, %v546
      %v560 = vsel %vm547, %v534, 0.0
      %v561 = vsel %vm547, %v538, 0.0
      %v562 = vsel %vm547, %v542, 0.0
      %v563 = vsel %vm547, %v546, 0.0
      %564 = vrot.lane.b32.xlu0 %v252, 111
      %v565 = vpop.permute.xlu0 %564
      %566 = vrot.lane.b32.xlu0 %v253, 111
      %v567 = vpop.permute.xlu0 %566
      %568 = vrot.lane.b32.xlu0 %v254, 111
      %v569 = vpop.permute.xlu0 %568
      %570 = vrot.lane.b32.xlu0 %v255, 111
      %v571 = vpop.permute.xlu0 %570
      %572 = vrot.lane.b32.xlu0 %v256, 111
      %v573 = vpop.permute.xlu0 %572
      %574 = vrot.lane.b32.xlu0 %v257, 111
      %v575 = vpop.permute.xlu0 %574
      %576 = vrot.lane.b32.xlu0 %v258, 111
      %v577 = vpop.permute.xlu0 %576
      %578 = vrot.lane.b32.xlu0 %v259, 111
      %v579 = vpop.permute.xlu0 %578
      %vm580 = vcmask 908288
      %v581 = vsel %vm580, %v565, %v567
      %v582 = vsel %vm580, %v569, %v571
      %v583 = vsel %vm580, %v573, %v575
      %v584 = vsel %vm580, %v577, %v579
      %v593 = vsel %vm580, %v567, 0.0
      %v594 = vsel %vm580, %v571, 0.0
      %v595 = vsel %vm580, %v575, 0.0
      %v596 = vsel %vm580, %v579, 0.0
      %v597 = vmul.f32 %v581, %v393
      %v598 = vmul.f32 %v593, %v397
      %v599 = vmul.f32 %v582, %v393
      %v600 = vmul.f32 %v594, %v397
      %v601 = vmul.f32 %v583, %v393
      %v602 = vmul.f32 %v595, %v397
      %v603 = vmul.f32 %v584, %v393
      %v604 = vmul.f32 %v596, %v397
      %v605 = vld [vmem:[%s2] sm:$0xff]
      %v606 = vld [vmem:[%s2 + $0x8] sm:$0xff]
      %v607 = vld [vmem:[%s2 + $0x10] sm:$0xff]
      %v608 = vld [vmem:[%s2 + $0x18] sm:$0xff]
      %v609 = vld [vmem:[%s2 + $0x20] sm:$0xff]
      %v610 = vld [vmem:[%s2 + $0x28] sm:$0xff]
      %v611 = vld [vmem:[%s2 + $0x30] sm:$0xff]
      %v612 = vld [vmem:[%s2 + $0x38] sm:$0xff]
      %v613 = vld [vmem:[%s2 + $0x40] sm:$0xff]
      %v614 = vld [vmem:[%s2 + $0x48] sm:$0xff]
      %v615 = vld [vmem:[%s2 + $0x50] sm:$0xff]
      %v616 = vld [vmem:[%s2 + $0x58] sm:$0xff]
      %v617 = vld [vmem:[%s3] sm:$0xff]
      %v618 = vld [vmem:[%s3 + $0x8] sm:$0xff]
      %v619 = vld [vmem:[%s3 + $0x10] sm:$0xff]
      %v620 = vld [vmem:[%s3 + $0x18] sm:$0xff]
      %622 = vset.pattern.permute.xlu0 0
      %623 = vperm.xlu0 %622, %v617
      %v624 = vpop.permute.xlu0 %623
      %627 = vset.pattern.permute.xlu0 0
      %628 = vperm.xlu0 %627, %v618
      %v629 = vpop.permute.xlu0 %628
      %632 = vset.pattern.permute.xlu0 0
      %633 = vperm.xlu0 %632, %v619
      %v634 = vpop.permute.xlu0 %633
      %637 = vset.pattern.permute.xlu0 0
      %638 = vperm.xlu0 %637, %v620
      %v639 = vpop.permute.xlu0 %638
      %vm641 = vcmask 261120
      %v643 = vsel %vm641, %v607, 0
      %v646 = vsel %vm641, %v610, 0
      %v649 = vsel %vm641, %v613, 0
      %v652 = vsel %vm641, %v616, 0
      %654 = vmatprep.subr.mxu0 %v448
      %655 = vmatpush1.msra.mxu0 %v447
      %656 = vmatprep.subr.mxu0 %v446
      %657 = vmatpush1.msra.mxu0 %v445
      %658 = vmatprep.subr.mxu0 %v444
      %659 = vmatpush1.msra.mxu0 %v443
      %660 = vmatprep.subr.mxu0 %v442
      %661 = vmatpush1.msra.mxu0 %v441
      %662 = vmatprep.subr.mxu0 %v407
      %663 = vmatpush1.msra.mxu0 %v406
      %664 = vmatprep.subr.mxu0 %v405
      %665 = vmatpush1.msra.mxu0 %v404
      %666 = vmatprep.subr.mxu0 %v403
      %667 = vmatpush1.msra.mxu0 %v402
      %668 = vmatprep.subr.mxu0 %v401
      %669 = vmatpush1.msra.mxu0 %v400
      %670 = vmatprep.subr.mxu0 %v343
      %671 = vmatpush1.msra.mxu0 %v355
      %672 = vmatprep.subr.mxu0 %v342
      %673 = vmatpush1.msra.mxu0 %v354
      %674 = vmatprep.subr.mxu0 %v341
      %675 = vmatpush1.msra.mxu0 %v353
      %676 = vmatprep.subr.mxu0 %v340
      %677 = vmatpush1.msra.mxu0 %v352
      %678 = vmatprep.subr.mxu0 %v322
      %679 = vmatpush1.msra.mxu0 %v321
      %680 = vmatprep.subr.mxu0 %v320
      %681 = vmatpush1.msra.mxu0 %v319
      %682 = vmatprep.subr.mxu0 %v318
      %683 = vmatpush1.msra.mxu0 %v317
      %684 = vmatprep.subr.mxu0 %v316
      %685 = vmatpush1.msra.mxu0 %v315
      %686 = vmatprep.subr.mxu0 %v563
      %687 = vmatpush2.msra.mxu0 %v551
      %688 = vmatprep.subr.mxu0 %v562
      %689 = vmatpush2.msra.mxu0 %v550
      %690 = vmatprep.subr.mxu0 %v561
      %691 = vmatpush2.msra.mxu0 %v549
      %692 = vmatprep.subr.mxu0 %v560
      %693 = vmatpush2.msra.mxu0 %v548
      %694 = vmatprep.subr.mxu0 %v530
      %695 = vmatpush2.msra.mxu0 %v529
      %696 = vmatprep.subr.mxu0 %v528
      %697 = vmatpush2.msra.mxu0 %v527
      %698 = vmatprep.subr.mxu0 %v526
      %699 = vmatpush2.msra.mxu0 %v525
      %700 = vmatprep.subr.mxu0 %v524
      %701 = vmatpush2.msra.mxu0 %v523
      %702 = vmatprep.subr.mxu0 %v489
      %703 = vmatpush2.msra.mxu0 %v488
      %704 = vmatprep.subr.mxu0 %v487
      %705 = vmatpush2.msra.mxu0 %v486
      %706 = vmatprep.subr.mxu0 %v485
      %707 = vmatpush2.msra.mxu0 %v484
      %708 = vmatprep.subr.mxu0 %v483
      %709 = vmatpush2.msra.mxu0 %v482
      %710 = vmatprep.subr.mxu0 %v259
      %711 = vmatpush2.msra.mxu0 %v258
      %712 = vmatprep.subr.mxu0 %v257
      %713 = vmatpush2.msra.mxu0 %v256
      %714 = vmatprep.subr.mxu0 %v255
      %715 = vmatpush2.msra.mxu0 %v254
      %716 = vmatprep.subr.mxu0 %v253
      %717 = vmatpush2.msra.mxu0 %v252
      %718 = vmatprep.mubr.f32.mxu0 %v606
      %719 = vmatmul.mubr.f32.gmra.mxu0 %v605
      %v720 = vpop.f32.mrf.mxu0
      %v721 = vadd.f32 %v624, %v720
      %v722 = vpop.f32.mrf.mxu0
      %v723 = vadd.f32 %v624, %v722
      %724 = vmatprep.mubr.f32.mxu0 %v609
      %725 = vmatmul.mubr.f32.gmra.mxu0 %v608
      %v726 = vpop.f32.mrf.mxu0
      %v727 = vadd.f32 %v629, %v726
      %v728 = vpop.f32.mrf.mxu0
      %v729 = vadd.f32 %v629, %v728
      %730 = vmatprep.mubr.f32.mxu0 %v612
      %731 = vmatmul.mubr.f32.gmra.mxu0 %v611
      %v732 = vpop.f32.mrf.mxu0
      %v733 = vadd.f32 %v634, %v732
      %v734 = vpop.f32.mrf.mxu0
      %v735 = vadd.f32 %v634, %v734
      %736 = vmatprep.mubr.f32.mxu0 %v615
      %737 = vmatmul.mubr.f32.gmra.mxu0 %v614
      %v738 = vpop.f32.mrf.mxu0
      %v739 = vadd.f32 %v639, %v738
      %v740 = vpop.f32.mrf.mxu0
      %v741 = vadd.f32 %v639, %v740
      %742 = vdwg.mxu0
      %743 = vmatprep.subr.mxu0 0.0
      %744 = vmatpush1.msra.mxu0 0.0
      %745 = vmatprep.subr.mxu0 0.0
      %746 = vmatpush1.msra.mxu0 0.0
      %747 = vmatprep.subr.mxu0 0.0
      %748 = vmatpush1.msra.mxu0 0.0
      %749 = vmatprep.subr.mxu0 0.0
      %750 = vmatpush1.msra.mxu0 0.0
      %751 = vmatprep.subr.mxu0 0.0
      %752 = vmatpush1.msra.mxu0 0.0
      %753 = vmatprep.subr.mxu0 0.0
      %754 = vmatpush1.msra.mxu0 0.0
      %755 = vmatprep.subr.mxu0 0.0
      %756 = vmatpush1.msra.mxu0 0.0
      %757 = vmatprep.subr.mxu0 0.0
      %758 = vmatpush1.msra.mxu0 0.0
      %759 = vmatprep.subr.mxu0 0.0
      %760 = vmatpush1.msra.mxu0 0.0
      %761 = vmatprep.subr.mxu0 0.0
      %762 = vmatpush1.msra.mxu0 0.0
      %763 = vmatprep.subr.mxu0 0.0
      %764 = vmatpush1.msra.mxu0 0.0
      %765 = vmatprep.subr.mxu0 0.0
      %766 = vmatpush1.msra.mxu0 0.0
      %767 = vmatprep.subr.mxu0 %v604
      %768 = vmatpush1.msra.mxu0 %v603
      %769 = vmatprep.subr.mxu0 %v602
      %770 = vmatpush1.msra.mxu0 %v601
      %771 = vmatprep.subr.mxu0 %v600
      %772 = vmatpush1.msra.mxu0 %v599
      %773 = vmatprep.subr.mxu0 %v598
      %774 = vmatpush1.msra.mxu0 %v597
      %775 = vmatprep.subr.mxu0 0.0
      %776 = vmatpush2.msra.mxu0 0.0
      %777 = vmatprep.subr.mxu0 0.0
      %778 = vmatpush2.msra.mxu0 0.0
      %779 = vmatprep.subr.mxu0 0.0
      %780 = vmatpush2.msra.mxu0 0.0
      %781 = vmatprep.subr.mxu0 0.0
      %782 = vmatpush2.msra.mxu0 0.0
      %783 = vmatprep.subr.mxu0 0.0
      %784 = vmatpush2.msra.mxu0 0.0
      %785 = vmatprep.subr.mxu0 0.0
      %786 = vmatpush2.msra.mxu0 0.0
      %787 = vmatprep.subr.mxu0 0.0
      %788 = vmatpush2.msra.mxu0 0.0
      %789 = vmatprep.subr.mxu0 0.0
      %790 = vmatpush2.msra.mxu0 0.0
      %791 = vmatprep.subr.mxu0 0.0
      %792 = vmatpush2.msra.mxu0 0.0
      %793 = vmatprep.subr.mxu0 0.0
      %794 = vmatpush2.msra.mxu0 0.0
      %795 = vmatprep.subr.mxu0 0.0
      %796 = vmatpush2.msra.mxu0 0.0
      %797 = vmatprep.subr.mxu0 0.0
      %798 = vmatpush2.msra.mxu0 0.0
      %799 = vmatprep.subr.mxu0 0.0
      %800 = vmatpush2.msra.mxu0 0.0
      %801 = vmatprep.subr.mxu0 0.0
      %802 = vmatpush2.msra.mxu0 0.0
      %803 = vmatprep.subr.mxu0 0.0
      %804 = vmatpush2.msra.mxu0 0.0
      %805 = vmatprep.subr.mxu0 0.0
      %806 = vmatpush2.msra.mxu0 0.0
      %807 = vmatprep.mubr.f32.mxu0 0.0
      %808 = vmatmul.mubr.f32.gmra.mxu0 %v643
      %v809 = vpop.f32.mrf.mxu0
      %v810 = vadd.f32 %v721, %v809
      %v811 = vpop.f32.mrf.mxu0
      %v812 = vadd.f32 %v723, %v811
      %813 = vmatprep.mubr.f32.mxu0 0.0
      %814 = vmatmul.mubr.f32.gmra.mxu0 %v646
      %v815 = vpop.f32.mrf.mxu0
      %v816 = vadd.f32 %v727, %v815
      %v817 = vpop.f32.mrf.mxu0
      %v818 = vadd.f32 %v729, %v817
      %819 = vmatprep.mubr.f32.mxu0 0.0
      %820 = vmatmul.mubr.f32.gmra.mxu0 %v649
      %v821 = vpop.f32.mrf.mxu0
      %v822 = vadd.f32 %v733, %v821
      %v823 = vpop.f32.mrf.mxu0
      %v824 = vadd.f32 %v735, %v823
      %825 = vmatprep.mubr.f32.mxu0 0.0
      %826 = vmatmul.mubr.f32.gmra.mxu0 %v652
      %v827 = vpop.f32.mrf.mxu0
      %v828 = vadd.f32 %v739, %v827
      %v829 = vpop.f32.mrf.mxu0
      %v830 = vadd.f32 %v741, %v829
      %831 = vdwg.mxu0
      %v832 = vmax.f32 %v810, 0.0
      %v833 = vmax.f32 %v812, 0.0
      %v834 = vmax.f32 %v816, 0.0
      %v835 = vmax.f32 %v818, 0.0
      %v836 = vmax.f32 %v822, 0.0
      %v837 = vmax.f32 %v824, 0.0
      %v838 = vmax.f32 %v828, 0.0
      %v839 = vmax.f32 %v830, 0.0
      %848 = vrot.lane.b32.xlu0 %v832, 17
      %v849 = vpop.permute.xlu0 %848
      %850 = vrot.lane.b32.xlu0 %v833, 17
      %v851 = vpop.permute.xlu0 %850
      %852 = vrot.lane.b32.xlu0 %v834, 17
      %v853 = vpop.permute.xlu0 %852
      %854 = vrot.lane.b32.xlu0 %v835, 17
      %v855 = vpop.permute.xlu0 %854
      %856 = vrot.lane.b32.xlu0 %v836, 17
      %v857 = vpop.permute.xlu0 %856
      %858 = vrot.lane.b32.xlu0 %v837, 17
      %v859 = vpop.permute.xlu0 %858
      %860 = vrot.lane.b32.xlu0 %v838, 17
      %v861 = vpop.permute.xlu0 %860
      %862 = vrot.lane.b32.xlu0 %v839, 17
      %v863 = vpop.permute.xlu0 %862
      %v864 = vsel %vm287, %v849, %v851
      %v865 = vsel %vm287, %v853, %v855
      %v866 = vsel %vm287, %v857, %v859
      %v867 = vsel %vm287, %v861, %v863
      %v876 = vsel %vm287, 0.0, %v849
      %v877 = vsel %vm287, 0.0, %v853
      %v878 = vsel %vm287, 0.0, %v857
      %v879 = vsel %vm287, 0.0, %v861
      %v880 = vmul.f32 %v876, %v308
      %v881 = vmul.f32 %v864, %v312
      %v882 = vmul.f32 %v877, %v308
      %v883 = vmul.f32 %v865, %v312
      %v884 = vmul.f32 %v878, %v308
      %v885 = vmul.f32 %v866, %v312
      %v886 = vmul.f32 %v879, %v308
      %v887 = vmul.f32 %v867, %v312
      %888 = vrot.lane.b32.xlu0 %v832, 16
      %v889 = vpop.permute.xlu0 %888
      %890 = vrot.lane.b32.xlu0 %v833, 16
      %v891 = vpop.permute.xlu0 %890
      %892 = vrot.lane.b32.xlu0 %v834, 16
      %v893 = vpop.permute.xlu0 %892
      %894 = vrot.lane.b32.xlu0 %v835, 16
      %v895 = vpop.permute.xlu0 %894
      %896 = vrot.lane.b32.xlu0 %v836, 16
      %v897 = vpop.permute.xlu0 %896
      %898 = vrot.lane.b32.xlu0 %v837, 16
      %v899 = vpop.permute.xlu0 %898
      %900 = vrot.lane.b32.xlu0 %v838, 16
      %v901 = vpop.permute.xlu0 %900
      %902 = vrot.lane.b32.xlu0 %v839, 16
      %v903 = vpop.permute.xlu0 %902
      %v904 = vsel %vm339, %v889, %v891
      %v905 = vsel %vm339, %v893, %v895
      %v906 = vsel %vm339, %v897, %v899
      %v907 = vsel %vm339, %v901, %v903
      %v916 = vsel %vm339, 0.0, %v889
      %v917 = vsel %vm339, 0.0, %v893
      %v918 = vsel %vm339, 0.0, %v897
      %v919 = vsel %vm339, 0.0, %v901
      %920 = vrot.lane.b32.xlu0 %v832, 15
      %v921 = vpop.permute.xlu0 %920
      %922 = vrot.lane.b32.xlu0 %v833, 15
      %v923 = vpop.permute.xlu0 %922
      %924 = vrot.lane.b32.xlu0 %v834, 15
      %v925 = vpop.permute.xlu0 %924
      %926 = vrot.lane.b32.xlu0 %v835, 15
      %v927 = vpop.permute.xlu0 %926
      %928 = vrot.lane.b32.xlu0 %v836, 15
      %v929 = vpop.permute.xlu0 %928
      %930 = vrot.lane.b32.xlu0 %v837, 15
      %v931 = vpop.permute.xlu0 %930
      %932 = vrot.lane.b32.xlu0 %v838, 15
      %v933 = vpop.permute.xlu0 %932
      %934 = vrot.lane.b32.xlu0 %v839, 15
      %v935 = vpop.permute.xlu0 %934
      %v936 = vsel %vm372, %v921, %v923
      %v937 = vsel %vm372, %v925, %v927
      %v938 = vsel %vm372, %v929, %v931
      %v939 = vsel %vm372, %v933, %v935
      %v948 = vsel %vm372, 0.0, %v921
      %v949 = vsel %vm372, 0.0, %v925
      %v950 = vsel %vm372, 0.0, %v929
      %v951 = vsel %vm372, 0.0, %v933
      %v952 = vmul.f32 %v948, %v393
      %v953 = vmul.f32 %v936, %v397
      %v954 = vmul.f32 %v949, %v393
      %v955 = vmul.f32 %v937, %v397
      %v956 = vmul.f32 %v950, %v393
      %v957 = vmul.f32 %v938, %v397
      %v958 = vmul.f32 %v951, %v393
      %v959 = vmul.f32 %v939, %v397
      %960 = vrot.lane.b32.xlu0 %v832, 1
      %v961 = vpop.permute.xlu0 %960
      %962 = vrot.lane.b32.xlu0 %v833, 1
      %v963 = vpop.permute.xlu0 %962
      %964 = vrot.lane.b32.xlu0 %v834, 1
      %v965 = vpop.permute.xlu0 %964
      %966 = vrot.lane.b32.xlu0 %v835, 1
      %v967 = vpop.permute.xlu0 %966
      %968 = vrot.lane.b32.xlu0 %v836, 1
      %v969 = vpop.permute.xlu0 %968
      %970 = vrot.lane.b32.xlu0 %v837, 1
      %v971 = vpop.permute.xlu0 %970
      %972 = vrot.lane.b32.xlu0 %v838, 1
      %v973 = vpop.permute.xlu0 %972
      %974 = vrot.lane.b32.xlu0 %v839, 1
      %v975 = vpop.permute.xlu0 %974
      %v976 = vsel %vm424, %v961, %v963
      %v977 = vsel %vm424, %v965, %v967
      %v978 = vsel %vm424, %v969, %v971
      %v979 = vsel %vm424, %v973, %v975
      %v988 = vsel %vm424, 0.0, %v961
      %v989 = vsel %vm424, 0.0, %v965
      %v990 = vsel %vm424, 0.0, %v969
      %v991 = vsel %vm424, 0.0, %v973
      %v992 = vmul.f32 %v988, %v308
      %v993 = vmul.f32 %v976, %v312
      %v994 = vmul.f32 %v989, %v308
      %v995 = vmul.f32 %v977, %v312
      %v996 = vmul.f32 %v990, %v308
      %v997 = vmul.f32 %v978, %v312
      %v998 = vmul.f32 %v991, %v308
      %v999 = vmul.f32 %v979, %v312
      %1000 = vrot.lane.b32.xlu0 %v832, 127
      %v1001 = vpop.permute.xlu0 %1000
      %1002 = vrot.lane.b32.xlu0 %v833, 127
      %v1003 = vpop.permute.xlu0 %1002
      %1004 = vrot.lane.b32.xlu0 %v834, 127
      %v1005 = vpop.permute.xlu0 %1004
      %1006 = vrot.lane.b32.xlu0 %v835, 127
      %v1007 = vpop.permute.xlu0 %1006
      %1008 = vrot.lane.b32.xlu0 %v836, 127
      %v1009 = vpop.permute.xlu0 %1008
      %1010 = vrot.lane.b32.xlu0 %v837, 127
      %v1011 = vpop.permute.xlu0 %1010
      %1012 = vrot.lane.b32.xlu0 %v838, 127
      %v1013 = vpop.permute.xlu0 %1012
      %1014 = vrot.lane.b32.xlu0 %v839, 127
      %v1015 = vpop.permute.xlu0 %1014
      %v1016 = vsel %vm465, %v1001, %v1003
      %v1017 = vsel %vm465, %v1005, %v1007
      %v1018 = vsel %vm465, %v1009, %v1011
      %v1019 = vsel %vm465, %v1013, %v1015
      %v1028 = vsel %vm465, %v1003, 0.0
      %v1029 = vsel %vm465, %v1007, 0.0
      %v1030 = vsel %vm465, %v1011, 0.0
      %v1031 = vsel %vm465, %v1015, 0.0
      %v1032 = vmul.f32 %v1016, %v393
      %v1033 = vmul.f32 %v1028, %v397
      %v1034 = vmul.f32 %v1017, %v393
      %v1035 = vmul.f32 %v1029, %v397
      %v1036 = vmul.f32 %v1018, %v393
      %v1037 = vmul.f32 %v1030, %v397
      %v1038 = vmul.f32 %v1019, %v393
      %v1039 = vmul.f32 %v1031, %v397
      %1040 = vrot.lane.b32.xlu0 %v832, 113
      %v1041 = vpop.permute.xlu0 %1040
      %1042 = vrot.lane.b32.xlu0 %v833, 113
      %v1043 = vpop.permute.xlu0 %1042
      %1044 = vrot.lane.b32.xlu0 %v834, 113
      %v1045 = vpop.permute.xlu0 %1044
      %1046 = vrot.lane.b32.xlu0 %v835, 113
      %v1047 = vpop.permute.xlu0 %1046
      %1048 = vrot.lane.b32.xlu0 %v836, 113
      %v1049 = vpop.permute.xlu0 %1048
      %1050 = vrot.lane.b32.xlu0 %v837, 113
      %v1051 = vpop.permute.xlu0 %1050
      %1052 = vrot.lane.b32.xlu0 %v838, 113
      %v1053 = vpop.permute.xlu0 %1052
      %1054 = vrot.lane.b32.xlu0 %v839, 113
      %v1055 = vpop.permute.xlu0 %1054
      %v1056 = vsel %vm506, %v1041, %v1043
      %v1057 = vsel %vm506, %v1045, %v1047
      %v1058 = vsel %vm506, %v1049, %v1051
      %v1059 = vsel %vm506, %v1053, %v1055
      %v1068 = vsel %vm506, %v1043, 0.0
      %v1069 = vsel %vm506, %v1047, 0.0
      %v1070 = vsel %vm506, %v1051, 0.0
      %v1071 = vsel %vm506, %v1055, 0.0
      %v1072 = vmul.f32 %v1056, %v308
      %v1073 = vmul.f32 %v1068, %v312
      %v1074 = vmul.f32 %v1057, %v308
      %v1075 = vmul.f32 %v1069, %v312
      %v1076 = vmul.f32 %v1058, %v308
      %v1077 = vmul.f32 %v1070, %v312
      %v1078 = vmul.f32 %v1059, %v308
      %v1079 = vmul.f32 %v1071, %v312
      %1080 = vrot.lane.b32.xlu0 %v832, 112
      %v1081 = vpop.permute.xlu0 %1080
      %1082 = vrot.lane.b32.xlu0 %v833, 112
      %v1083 = vpop.permute.xlu0 %1082
      %1084 = vrot.lane.b32.xlu0 %v834, 112
      %v1085 = vpop.permute.xlu0 %1084
      %1086 = vrot.lane.b32.xlu0 %v835, 112
      %v1087 = vpop.permute.xlu0 %1086
      %1088 = vrot.lane.b32.xlu0 %v836, 112
      %v1089 = vpop.permute.xlu0 %1088
      %1090 = vrot.lane.b32.xlu0 %v837, 112
      %v1091 = vpop.permute.xlu0 %1090
      %1092 = vrot.lane.b32.xlu0 %v838, 112
      %v1093 = vpop.permute.xlu0 %1092
      %1094 = vrot.lane.b32.xlu0 %v839, 112
      %v1095 = vpop.permute.xlu0 %1094
      %v1096 = vsel %vm547, %v1081, %v1083
      %v1097 = vsel %vm547, %v1085, %v1087
      %v1098 = vsel %vm547, %v1089, %v1091
      %v1099 = vsel %vm547, %v1093, %v1095
      %v1108 = vsel %vm547, %v1083, 0.0
      %v1109 = vsel %vm547, %v1087, 0.0
      %v1110 = vsel %vm547, %v1091, 0.0
      %v1111 = vsel %vm547, %v1095, 0.0
      %1112 = vrot.lane.b32.xlu0 %v832, 111
      %v1113 = vpop.permute.xlu0 %1112
      %1114 = vrot.lane.b32.xlu0 %v833, 111
      %v1115 = vpop.permute.xlu0 %1114
      %1116 = vrot.lane.b32.xlu0 %v834, 111
      %v1117 = vpop.permute.xlu0 %1116
      %1118 = vrot.lane.b32.xlu0 %v835, 111
      %v1119 = vpop.permute.xlu0 %1118
      %1120 = vrot.lane.b32.xlu0 %v836, 111
      %v1121 = vpop.permute.xlu0 %1120
      %1122 = vrot.lane.b32.xlu0 %v837, 111
      %v1123 = vpop.permute.xlu0 %1122
      %1124 = vrot.lane.b32.xlu0 %v838, 111
      %v1125 = vpop.permute.xlu0 %1124
      %1126 = vrot.lane.b32.xlu0 %v839, 111
      %v1127 = vpop.permute.xlu0 %1126
      %v1128 = vsel %vm580, %v1113, %v1115
      %v1129 = vsel %vm580, %v1117, %v1119
      %v1130 = vsel %vm580, %v1121, %v1123
      %v1131 = vsel %vm580, %v1125, %v1127
      %v1140 = vsel %vm580, %v1115, 0.0
      %v1141 = vsel %vm580, %v1119, 0.0
      %v1142 = vsel %vm580, %v1123, 0.0
      %v1143 = vsel %vm580, %v1127, 0.0
      %v1144 = vmul.f32 %v1128, %v393
      %v1145 = vmul.f32 %v1140, %v397
      %v1146 = vmul.f32 %v1129, %v393
      %v1147 = vmul.f32 %v1141, %v397
      %v1148 = vmul.f32 %v1130, %v393
      %v1149 = vmul.f32 %v1142, %v397
      %v1150 = vmul.f32 %v1131, %v393
      %v1151 = vmul.f32 %v1143, %v397
      %v1152 = vld [vmem:[%s4] sm:$0xff]
      %v1153 = vld [vmem:[%s4 + $0x8] sm:$0xff]
      %v1154 = vld [vmem:[%s4 + $0x10] sm:$0xff]
      %v1155 = vld [vmem:[%s4 + $0x18] sm:$0xff]
      %v1156 = vld [vmem:[%s4 + $0x20] sm:$0xff]
      %v1157 = vld [vmem:[%s4 + $0x28] sm:$0xff]
      %v1158 = vld [vmem:[%s4 + $0x30] sm:$0xff]
      %v1159 = vld [vmem:[%s4 + $0x38] sm:$0xff]
      %v1160 = vld [vmem:[%s4 + $0x40] sm:$0xff]
      %v1161 = vld [vmem:[%s4 + $0x48] sm:$0xff]
      %v1162 = vld [vmem:[%s4 + $0x50] sm:$0xff]
      %v1163 = vld [vmem:[%s4 + $0x58] sm:$0xff]
      %v1164 = vld [vmem:[%s5] sm:$0xff]
      %v1165 = vld [vmem:[%s5 + $0x8] sm:$0xff]
      %v1166 = vld [vmem:[%s5 + $0x10] sm:$0xff]
      %v1167 = vld [vmem:[%s5 + $0x18] sm:$0xff]
      %1169 = vset.pattern.permute.xlu0 0
      %1170 = vperm.xlu0 %1169, %v1164
      %v1171 = vpop.permute.xlu0 %1170
      %1174 = vset.pattern.permute.xlu0 0
      %1175 = vperm.xlu0 %1174, %v1165
      %v1176 = vpop.permute.xlu0 %1175
      %1179 = vset.pattern.permute.xlu0 0
      %1180 = vperm.xlu0 %1179, %v1166
      %v1181 = vpop.permute.xlu0 %1180
      %1184 = vset.pattern.permute.xlu0 0
      %1185 = vperm.xlu0 %1184, %v1167
      %v1186 = vpop.permute.xlu0 %1185
      %v1189 = vsel %vm641, %v1154, 0
      %v1192 = vsel %vm641, %v1157, 0
      %v1195 = vsel %vm641, %v1160, 0
      %v1198 = vsel %vm641, %v1163, 0
      %1200 = vmatprep.subr.mxu0 %v999
      %1201 = vmatpush1.msra.mxu0 %v998
      %1202 = vmatprep.subr.mxu0 %v997
      %1203 = vmatpush1.msra.mxu0 %v996
      %1204 = vmatprep.subr.mxu0 %v995
      %1205 = vmatpush1.msra.mxu0 %v994
      %1206 = vmatprep.subr.mxu0 %v993
      %1207 = vmatpush1.msra.mxu0 %v992
      %1208 = vmatprep.subr.mxu0 %v959
      %1209 = vmatpush1.msra.mxu0 %v958
      %1210 = vmatprep.subr.mxu0 %v957
      %1211 = vmatpush1.msra.mxu0 %v956
      %1212 = vmatprep.subr.mxu0 %v955
      %1213 = vmatpush1.msra.mxu0 %v954
      %1214 = vmatprep.subr.mxu0 %v953
      %1215 = vmatpush1.msra.mxu0 %v952
      %1216 = vmatprep.subr.mxu0 %v907
      %1217 = vmatpush1.msra.mxu0 %v919
      %1218 = vmatprep.subr.mxu0 %v906
      %1219 = vmatpush1.msra.mxu0 %v918
      %1220 = vmatprep.subr.mxu0 %v905
      %1221 = vmatpush1.msra.mxu0 %v917
      %1222 = vmatprep.subr.mxu0 %v904
      %1223 = vmatpush1.msra.mxu0 %v916
      %1224 = vmatprep.subr.mxu0 %v887
      %1225 = vmatpush1.msra.mxu0 %v886
      %1226 = vmatprep.subr.mxu0 %v885
      %1227 = vmatpush1.msra.mxu0 %v884
      %1228 = vmatprep.subr.mxu0 %v883
      %1229 = vmatpush1.msra.mxu0 %v882
      %1230 = vmatprep.subr.mxu0 %v881
      %1231 = vmatpush1.msra.mxu0 %v880
      %1232 = vmatprep.subr.mxu0 %v1111
      %1233 = vmatpush2.msra.mxu0 %v1099
      %1234 = vmatprep.subr.mxu0 %v1110
      %1235 = vmatpush2.msra.mxu0 %v1098
      %1236 = vmatprep.subr.mxu0 %v1109
      %1237 = vmatpush2.msra.mxu0 %v1097
      %1238 = vmatprep.subr.mxu0 %v1108
      %1239 = vmatpush2.msra.mxu0 %v1096
      %1240 = vmatprep.subr.mxu0 %v1079
      %1241 = vmatpush2.msra.mxu0 %v1078
      %1242 = vmatprep.subr.mxu0 %v1077
      %1243 = vmatpush2.msra.mxu0 %v1076
      %1244 = vmatprep.subr.mxu0 %v1075
      %1245 = vmatpush2.msra.mxu0 %v1074
      %1246 = vmatprep.subr.mxu0 %v1073
      %1247 = vmatpush2.msra.mxu0 %v1072
      %1248 = vmatprep.subr.mxu0 %v1039
      %1249 = vmatpush2.msra.mxu0 %v1038
      %1250 = vmatprep.subr.mxu0 %v1037
      %1251 = vmatpush2.msra.mxu0 %v1036
      %1252 = vmatprep.subr.mxu0 %v1035
      %1253 = vmatpush2.msra.mxu0 %v1034
      %1254 = vmatprep.subr.mxu0 %v1033
      %1255 = vmatpush2.msra.mxu0 %v1032
      %1256 = vmatprep.subr.mxu0 %v839
      %1257 = vmatpush2.msra.mxu0 %v838
      %1258 = vmatprep.subr.mxu0 %v837
      %1259 = vmatpush2.msra.mxu0 %v836
      %1260 = vmatprep.subr.mxu0 %v835
      %1261 = vmatpush2.msra.mxu0 %v834
      %1262 = vmatprep.subr.mxu0 %v833
      %1263 = vmatpush2.msra.mxu0 %v832
      %1264 = vmatprep.mubr.f32.mxu0 %v1153
      %1265 = vmatmul.mubr.f32.gmra.mxu0 %v1152
      %v1266 = vpop.f32.mrf.mxu0
      %v1267 = vadd.f32 %v1171, %v1266
      %v1268 = vpop.f32.mrf.mxu0
      %v1269 = vadd.f32 %v1171, %v1268
      %1270 = vmatprep.mubr.f32.mxu0 %v1156
      %1271 = vmatmul.mubr.f32.gmra.mxu0 %v1155
      %v1272 = vpop.f32.mrf.mxu0
      %v1273 = vadd.f32 %v1176, %v1272
      %v1274 = vpop.f32.mrf.mxu0
      %v1275 = vadd.f32 %v1176, %v1274
      %1276 = vmatprep.mubr.f32.mxu0 %v1159
      %1277 = vmatmul.mubr.f32.gmra.mxu0 %v1158
      %v1278 = vpop.f32.mrf.mxu0
      %v1279 = vadd.f32 %v1181, %v1278
      %v1280 = vpop.f32.mrf.mxu0
      %v1281 = vadd.f32 %v1181, %v1280
      %1282 = vmatprep.mubr.f32.mxu0 %v1162
      %1283 = vmatmul.mubr.f32.gmra.mxu0 %v1161
      %v1284 = vpop.f32.mrf.mxu0
      %v1285 = vadd.f32 %v1186, %v1284
      %v1286 = vpop.f32.mrf.mxu0
      %v1287 = vadd.f32 %v1186, %v1286
      %1288 = vdwg.mxu0
      %1289 = vmatprep.subr.mxu0 0.0
      %1290 = vmatpush1.msra.mxu0 0.0
      %1291 = vmatprep.subr.mxu0 0.0
      %1292 = vmatpush1.msra.mxu0 0.0
      %1293 = vmatprep.subr.mxu0 0.0
      %1294 = vmatpush1.msra.mxu0 0.0
      %1295 = vmatprep.subr.mxu0 0.0
      %1296 = vmatpush1.msra.mxu0 0.0
      %1297 = vmatprep.subr.mxu0 0.0
      %1298 = vmatpush1.msra.mxu0 0.0
      %1299 = vmatprep.subr.mxu0 0.0
      %1300 = vmatpush1.msra.mxu0 0.0
      %1301 = vmatprep.subr.mxu0 0.0
      %1302 = vmatpush1.msra.mxu0 0.0
      %1303 = vmatprep.subr.mxu0 0.0
      %1304 = vmatpush1.msra.mxu0 0.0
      %1305 = vmatprep.subr.mxu0 0.0
      %1306 = vmatpush1.msra.mxu0 0.0
      %1307 = vmatprep.subr.mxu0 0.0
      %1308 = vmatpush1.msra.mxu0 0.0
      %1309 = vmatprep.subr.mxu0 0.0
      %1310 = vmatpush1.msra.mxu0 0.0
      %1311 = vmatprep.subr.mxu0 0.0
      %1312 = vmatpush1.msra.mxu0 0.0
      %1313 = vmatprep.subr.mxu0 %v1151
      %1314 = vmatpush1.msra.mxu0 %v1150
      %1315 = vmatprep.subr.mxu0 %v1149
      %1316 = vmatpush1.msra.mxu0 %v1148
      %1317 = vmatprep.subr.mxu0 %v1147
      %1318 = vmatpush1.msra.mxu0 %v1146
      %1319 = vmatprep.subr.mxu0 %v1145
      %1320 = vmatpush1.msra.mxu0 %v1144
      %1321 = vmatprep.subr.mxu0 0.0
      %1322 = vmatpush2.msra.mxu0 0.0
      %1323 = vmatprep.subr.mxu0 0.0
      %1324 = vmatpush2.msra.mxu0 0.0
      %1325 = vmatprep.subr.mxu0 0.0
      %1326 = vmatpush2.msra.mxu0 0.0
      %1327 = vmatprep.subr.mxu0 0.0
      %1328 = vmatpush2.msra.mxu0 0.0
      %1329 = vmatprep.subr.mxu0 0.0
      %1330 = vmatpush2.msra.mxu0 0.0
      %1331 = vmatprep.subr.mxu0 0.0
      %1332 = vmatpush2.msra.mxu0 0.0
      %1333 = vmatprep.subr.mxu0 0.0
      %1334 = vmatpush2.msra.mxu0 0.0
      %1335 = vmatprep.subr.mxu0 0.0
      %1336 = vmatpush2.msra.mxu0 0.0
      %1337 = vmatprep.subr.mxu0 0.0
      %1338 = vmatpush2.msra.mxu0 0.0
      %1339 = vmatprep.subr.mxu0 0.0
      %1340 = vmatpush2.msra.mxu0 0.0
      %1341 = vmatprep.subr.mxu0 0.0
      %1342 = vmatpush2.msra.mxu0 0.0
      %1343 = vmatprep.subr.mxu0 0.0
      %1344 = vmatpush2.msra.mxu0 0.0
      %1345 = vmatprep.subr.mxu0 0.0
      %1346 = vmatpush2.msra.mxu0 0.0
      %1347 = vmatprep.subr.mxu0 0.0
      %1348 = vmatpush2.msra.mxu0 0.0
      %1349 = vmatprep.subr.mxu0 0.0
      %1350 = vmatpush2.msra.mxu0 0.0
      %1351 = vmatprep.subr.mxu0 0.0
      %1352 = vmatpush2.msra.mxu0 0.0
      %1353 = vmatprep.mubr.f32.mxu0 0.0
      %1354 = vmatmul.mubr.f32.gmra.mxu0 %v1189
      %v1355 = vpop.f32.mrf.mxu0
      %v1356 = vadd.f32 %v1267, %v1355
      %v1357 = vpop.f32.mrf.mxu0
      %v1358 = vadd.f32 %v1269, %v1357
      %1359 = vmatprep.mubr.f32.mxu0 0.0
      %1360 = vmatmul.mubr.f32.gmra.mxu0 %v1192
      %v1361 = vpop.f32.mrf.mxu0
      %v1362 = vadd.f32 %v1273, %v1361
      %v1363 = vpop.f32.mrf.mxu0
      %v1364 = vadd.f32 %v1275, %v1363
      %1365 = vmatprep.mubr.f32.mxu0 0.0
      %1366 = vmatmul.mubr.f32.gmra.mxu0 %v1195
      %v1367 = vpop.f32.mrf.mxu0
      %v1368 = vadd.f32 %v1279, %v1367
      %v1369 = vpop.f32.mrf.mxu0
      %v1370 = vadd.f32 %v1281, %v1369
      %1371 = vmatprep.mubr.f32.mxu0 0.0
      %1372 = vmatmul.mubr.f32.gmra.mxu0 %v1198
      %v1373 = vpop.f32.mrf.mxu0
      %v1374 = vadd.f32 %v1285, %v1373
      %v1375 = vpop.f32.mrf.mxu0
      %v1376 = vadd.f32 %v1287, %v1375
      %1377 = vdwg.mxu0
      %v1378 = vadd.f32 %v1356, %v252
      %v1379 = vadd.f32 %v1358, %v253
      %v1380 = vadd.f32 %v1362, %v254
      %v1381 = vadd.f32 %v1364, %v255
      %v1382 = vadd.f32 %v1368, %v256
      %v1383 = vadd.f32 %v1370, %v257
      %v1384 = vadd.f32 %v1374, %v258
      %v1385 = vadd.f32 %v1376, %v259
      %v1386 = vmax.f32 %v1378, 0.0
      %v1387 = vmax.f32 %v1379, 0.0
      %v1388 = vmax.f32 %v1380, 0.0
      %v1389 = vmax.f32 %v1381, 0.0
      %v1390 = vmax.f32 %v1382, 0.0
      %v1391 = vmax.f32 %v1383, 0.0
      %v1392 = vmax.f32 %v1384, 0.0
      %v1393 = vmax.f32 %v1385, 0.0
      %1394 = vst [vmem:[%s251] sm:$0xff] %v1386
      %1395 = vst [vmem:[%s251 + $0x8] sm:$0xff] %v1387
      %1396 = vst [vmem:[%s251 + $0x10] sm:$0xff] %v1388
      %1397 = vst [vmem:[%s251 + $0x18] sm:$0xff] %v1389
      %1398 = vst [vmem:[%s251 + $0x20] sm:$0xff] %v1390
      %1399 = vst [vmem:[%s251 + $0x28] sm:$0xff] %v1391
      %1400 = vst [vmem:[%s251 + $0x30] sm:$0xff] %v1392
      %1401 = vst [vmem:[%s251 + $0x38] sm:$0xff] %v1393
      %p1402 = scmp.lt.s32.totalorder %s17, 1
      %s1403 = scalar_select %p1402, %s17, 1
      %s1404 = smul.addr %s1403, 8
      %s1405 = smul.addr %s1404, 8
      %s1406 = scalar_lea.vmem %s6, %s1405
      // Predicated region
      $region45: #{resnet_block_forward.1} parent=43 // pred_check
        %p1407 = pneg %p166
      $region46: #{resnet_block_forward.1} parent=43 // pred_check_branch
        %1409 = sbr.rel (%p1407) target = $region48
      $region47: #{resnet_block_forward.1} parent=43 // pred_region
        _
      $region48: #{resnet_block_forward.1} parent=43 // pred_fallthru
        _
    $region44: #{resnet_block_forward.1} parent=5 // pred_fallthru
      _
    %p1410 = scmp.le.s32.totalorder 2, %s12
    // Predicated region
    $region49: #{resnet_block_forward.1} parent=5 // pred_check
      %p1411 = pneg %p1410
    $region50: #{resnet_block_forward.1} parent=5 // pred_check_branch
      %1413 = sbr.rel (%p1411) target = $region52
    $region51: #{resnet_block_forward.1} parent=5 // pred_region
      %s1414 = ssub.s32 %s12, 2
      // Predicated region
      $region53: #{resnet_block_forward.1} parent=51 // pred_check
        %p1415 = pneg %p172
      $region54: #{resnet_block_forward.1} parent=51 // pred_check_branch
        %1417 = sbr.rel (%p1415) target = $region56
      $region55: #{resnet_block_forward.1} parent=51 // pred_region
        %p1418 = scmp.lt.s32.totalorder %s18, 1
        %s1419 = scalar_select %p1418, %s18, 1
        %s1420 = smul.addr %s1419, 8
        %s1421 = smul.addr %s1420, 8
        %s1422 = scalar_lea.vmem %s6, %s1421
      $region56: #{resnet_block_forward.1} parent=51 // pred_fallthru
        _
    $region52: #{resnet_block_forward.1} parent=5 // pred_fallthru
      _
  $region6: #{resnet_block_forward.1} parent=0 // loop_footer
    %s16 = sadd.s32 1, %s12
  $region7: #{resnet_block_forward.1} parent=0 // loop_footer_branch
    %11 = sbr.rel target = $region3
  $region8: #{resnet_block_forward.1} parent=0 // loop_exit
    _

</llo_original>
